<compile_context>
chip_gen: v5e
topology: v5e:2x2
jax: 0.10.0
libtpu: 0.0.40
codegen_flags: <defaults>
</compile_context>

<pallas_src>
import functools

import jax
import jax.numpy as jnp
from jax.experimental import pallas as pl
from jax.experimental.pallas import tpu as pltpu

INPUT_SIZE = 8
HIDDEN_DIM = 16
OUTPUT_SIZE = 4
N_LAYERS = 2


def _slab_layout(input_size, hidden_dim):
    """Row offsets of the single packed weight slab (lane width = 2*hidden_dim)."""
    w = 2 * hidden_dim
    a0_off = 0
    a0_rows = -(-input_size // 8) * 8          # round up to 8 sublanes
    combo_off = a0_off + a0_rows               # (2H, 2H) block-diag recurrence weights
    bias_off = combo_off + w                   # 8-row bias block
    fc_off = bias_off + 8                      # (2H, 2H) zero-padded FC block
    total = fc_off + w
    return dict(a0=a0_off, combo=combo_off, b_l0=bias_off, b_full=bias_off + 1,
                b_fc=bias_off + 2, fc=fc_off, rows=total, width=w)


def _rnn_kernel(T, B, input_size, hidden_dim, output_size, lay,
                x_ref, w_ref, out_ref):
    """x_ref: (T*B, I) time-major input; w_ref: (rows, 2H) packed slab; out_ref: (B, O)."""
    H = hidden_dim
    W = 2 * H
    O = output_size

    # ---- Hoisted weight loads (static slices, once per call) -------------------
    a0 = w_ref[lay["a0"]:lay["a0"] + input_size, :]          # (I, 2H), right half == 0
    combo = w_ref[lay["combo"]:lay["combo"] + W, :]          # (2H, 2H) block matrix
    fc = w_ref[lay["fc"]:lay["fc"] + W, :]                   # (2H, 2H), only [H:, :O] non-zero
    b_l0_row = w_ref[lay["b_l0"]:lay["b_l0"] + 1, :]         # (1, 2H) = [b0 | 0]
    b_full_row = w_ref[lay["b_full"]:lay["b_full"] + 1, :]   # (1, 2H) = [b0 | b1]
    b_fc_row = w_ref[lay["b_fc"]:lay["b_fc"] + 1, :]         # (1, 2H) = [b_fc | 0]

    b_l0 = jnp.broadcast_to(b_l0_row, (B, W))
    b_full = jnp.broadcast_to(b_full_row, (B, W))
    b_fc = jnp.broadcast_to(b_fc_row, (B, W))

    # ---- (1) Layer-0 input projection for all timesteps: one MXU matmul --------
    # p[:, :H] = x_t @ W_ih0^T  ;  p[:, H:] == 0 exactly (a0 right half is zero).
    p = jnp.dot(x_ref[...], a0, preferred_element_type=jnp.float32)        # (T*B, 2H)
    addend = p + jnp.broadcast_to(b_full_row, (T * B, W))                  # used for s >= 1

    # ---- (2) Wavefront-packed recurrence: h = [h0(s), h1(s-1)], (B, 2H) --------
    # s = 0: h0(0) = tanh(x0 @ Wih0^T + b0), h1(-1) = 0  (no matmul needed).
    h = jnp.tanh(p[0:B, :] + b_l0)
    # s = 1 .. T-1: one (B,2H)@(2H,2H) MXU push + one tanh per serial round.
    for s in range(1, T):
        h = jnp.tanh(jnp.dot(h, combo, preferred_element_type=jnp.float32)
                     + addend[s * B:(s + 1) * B, :])
    # Final wavefront step: right half becomes h1(T-1); left half is don't-care
    # (it lacks the non-existent x[T] term) and is zeroed by the FC block below.
    h = jnp.tanh(jnp.dot(h, combo, preferred_element_type=jnp.float32) + b_full)

    # ---- (3) Final Linear folded onto the wide state ----------------------------
    y = jnp.dot(h, fc, preferred_element_type=jnp.float32) + b_fc          # (B, 2H)
    out_ref[...] = y[:, :O].astype(out_ref.dtype)


def pack_params(params, *, input_size=INPUT_SIZE, hidden_dim=HIDDEN_DIM,
                output_size=OUTPUT_SIZE, n_layers=N_LAYERS):
    """One-time packing of PyTorch-layout weights into a single VMEM slab."""
    assert n_layers == 2, "wavefront-packed kernel is specialized for n_layers == 2"
    H, O, I = hidden_dim, output_size, input_size
    W = 2 * H
    lay = _slab_layout(I, H)

    w_ih0, w_hh0, b_ih0, b_hh0 = params["rnn"][0]
    w_ih1, w_hh1, b_ih1, b_hh1 = params["rnn"][1]
    w_fc, b_fc = params["fc"]
    b0 = b_ih0 + b_hh0
    b1 = b_ih1 + b_hh1

    slab = jnp.zeros((lay["rows"], W), jnp.float32)
    # A0_wide: [W_ih0^T | 0]
    slab = slab.at[lay["a0"]:lay["a0"] + I, :H].set(w_ih0.T)
    # W_combo block matrix: [[W_hh0^T, W_ih1^T], [0, W_hh1^T]]
    c = lay["combo"]
    slab = slab.at[c:c + H, :H].set(w_hh0.T)
    slab = slab.at[c:c + H, H:].set(w_ih1.T)
    slab = slab.at[c + H:c + W, H:].set(w_hh1.T)
    # bias rows
    slab = slab.at[lay["b_l0"], :H].set(b0)
    slab = slab.at[lay["b_full"], :H].set(b0)
    slab = slab.at[lay["b_full"], H:].set(b1)
    slab = slab.at[lay["b_fc"], :O].set(b_fc)
    # FC block: bottom half rows hold W_fc^T, everything else zero
    slab = slab.at[lay["fc"] + H:lay["fc"] + W, :O].set(w_fc.T)
    return slab


def my_rnn_net_forward(x, slab, *, input_size=INPUT_SIZE, hidden_dim=HIDDEN_DIM,
                       output_size=OUTPUT_SIZE, n_layers=N_LAYERS):
    assert n_layers == 2
    B = x.shape[0]
    x3 = x.reshape(B, -1, input_size)                 # == torch x.view(B, -1, I)
    T = x3.shape[1]
    assert T >= 1, "degenerate sequence length"
    # Time-major flatten: timestep t occupies rows [t*B, (t+1)*B); the kernel's
    # layer-0 projection is then a single (T*B, I) @ (I, 2H) matmul.
    x_tm = jnp.transpose(x3, (1, 0, 2)).reshape(T * B, input_size)

    lay = _slab_layout(input_size, hidden_dim)
    kernel = functools.partial(_rnn_kernel, T, B, input_size, hidden_dim,
                               output_size, lay)

    flops = (2 * T * B * hidden_dim * (input_size + 3 * hidden_dim)
             + 2 * B * hidden_dim * output_size)
    cost = pl.CostEstimate(
        flops=int(flops),
        transcendentals=int(T * n_layers * B * hidden_dim),
        bytes_accessed=int(4 * (x_tm.size + slab.size + B * output_size)))

    return pl.pallas_call(
        kernel,
        out_shape=jax.ShapeDtypeStruct((B, output_size), jnp.float32),
        # Whole arrays in VMEM, single invocation (no grid / pipelining needed).
        in_specs=[pl.BlockSpec(memory_space=pltpu.MemorySpace.VMEM),
                  pl.BlockSpec(memory_space=pltpu.MemorySpace.VMEM)],
        out_specs=pl.BlockSpec(memory_space=pltpu.MemorySpace.VMEM),
        cost_estimate=cost,
    )(x_tm, slab)


def init_params(key, *, input_size=INPUT_SIZE, hidden_dim=HIDDEN_DIM,
                output_size=OUTPUT_SIZE, n_layers=N_LAYERS):
    """Deterministic init mimicking PyTorch's U(-1/sqrt(H), 1/sqrt(H))."""
    bound = 1.0 / float(hidden_dim) ** 0.5
    params = {"rnn": []}
    for l in range(n_layers):
        in_dim = input_size if l == 0 else hidden_dim
        key, k1, k2, k3, k4 = jax.random.split(key, 5)
        params["rnn"].append((
            jax.random.uniform(k1, (hidden_dim, in_dim), jnp.float32, -bound, bound),
            jax.random.uniform(k2, (hidden_dim, hidden_dim), jnp.float32, -bound, bound),
            jax.random.uniform(k3, (hidden_dim,), jnp.float32, -bound, bound),
            jax.random.uniform(k4, (hidden_dim,), jnp.float32, -bound, bound),
        ))
    key, k1, k2 = jax.random.split(key, 3)
    params["fc"] = (
        jax.random.uniform(k1, (output_size, hidden_dim), jnp.float32, -bound, bound),
        jax.random.uniform(k2, (output_size,), jnp.float32, -bound, bound),
    )
    return params


def reference_forward(x, params, *, input_size=INPUT_SIZE,
                      hidden_dim=HIDDEN_DIM, n_layers=N_LAYERS):
    """Pure-JAX reference matching nn.RNN(tanh, batch_first) + nn.Linear."""
    hi = jax.lax.Precision.HIGHEST
    B = x.shape[0]
    x = x.reshape(B, -1, input_size)
    T = x.shape[1]
    h = [jnp.zeros((B, hidden_dim), jnp.float32) for _ in range(n_layers)]
    inp = None
    for t in range(T):
        inp = x[:, t, :]
        for l in range(n_layers):
            w_ih, w_hh, b_ih, b_hh = params["rnn"][l]
            h[l] = jnp.tanh(jnp.dot(inp, w_ih.T, precision=hi) + b_ih
                            + jnp.dot(h[l], w_hh.T, precision=hi) + b_hh)
            inp = h[l]
    wfc, bfc = params["fc"]
    return jnp.dot(inp, wfc.T, precision=hi) + bfc


if __name__ == "__main__":
    key = jax.random.PRNGKey(0)
    kx, kp = jax.random.split(key)

    # B=2, flattened features 64 -> view(B, -1, input_size=8) gives T=8.
    x = jax.random.normal(kx, (2, 64), jnp.float32)
    params = init_params(kp)
    slab = pack_params(params)            # one-time weight packing

    out = my_rnn_net_forward(x, slab)
    out = jax.block_until_ready(out)

    ref = reference_forward(x, params)
    assert out.shape == (2, OUTPUT_SIZE)
    max_err = float(jnp.max(jnp.abs(out - ref)))
    assert jnp.allclose(out, ref, atol=1e-4, rtol=1e-4), (max_err, out, ref)

    print("KERNEL_OK")
</pallas_src>

<mosaic_0001>
module attributes {stable_mosaic.version = 11 : i64} {
  func.func @_rnn_kernel(%arg0: memref<16x8xf32, #tpu.memory_space<vmem>>, %arg1: memref<80x32xf32, #tpu.memory_space<vmem>>, %arg2: memref<2x4xf32, #tpu.memory_space<vmem>>) attributes {dimension_semantics = [], scalar_prefetch = 0 : i64, scratch_operands = 0 : i64, tpu.core_type = #tpu.core_type<tc>} {
    %c0 = arith.constant 0 : index
    %c0_0 = arith.constant 0 : index
    %0 = vector.load %arg1[%c0, %c0_0] : memref<80x32xf32, #tpu.memory_space<vmem>>, vector<8x32xf32>
    %c8 = arith.constant 8 : index
    %c0_1 = arith.constant 0 : index
    %1 = vector.load %arg1[%c8, %c0_1] : memref<80x32xf32, #tpu.memory_space<vmem>>, vector<32x32xf32>
    %c48 = arith.constant 48 : index
    %c0_2 = arith.constant 0 : index
    %2 = vector.load %arg1[%c48, %c0_2] : memref<80x32xf32, #tpu.memory_space<vmem>>, vector<32x32xf32>
    %c40 = arith.constant 40 : index
    %c0_3 = arith.constant 0 : index
    %3 = vector.load %arg1[%c40, %c0_3] : memref<80x32xf32, #tpu.memory_space<vmem>>, vector<1x32xf32>
    %c41 = arith.constant 41 : index
    %c0_4 = arith.constant 0 : index
    %4 = vector.load %arg1[%c41, %c0_4] : memref<80x32xf32, #tpu.memory_space<vmem>>, vector<1x32xf32>
    %c42 = arith.constant 42 : index
    %c0_5 = arith.constant 0 : index
    %5 = vector.load %arg1[%c42, %c0_5] : memref<80x32xf32, #tpu.memory_space<vmem>>, vector<1x32xf32>
    %6 = vector.shape_cast %3 : vector<1x32xf32> to vector<1x32xf32>
    %7 = vector.broadcast %6 : vector<1x32xf32> to vector<2x32xf32>
    %8 = vector.shape_cast %4 : vector<1x32xf32> to vector<1x32xf32>
    %9 = vector.broadcast %8 : vector<1x32xf32> to vector<2x32xf32>
    %10 = vector.shape_cast %5 : vector<1x32xf32> to vector<1x32xf32>
    %11 = vector.broadcast %10 : vector<1x32xf32> to vector<2x32xf32>
    %c0_6 = arith.constant 0 : index
    %c0_7 = arith.constant 0 : index
    %12 = vector.load %arg0[%c0_6, %c0_7] : memref<16x8xf32, #tpu.memory_space<vmem>>, vector<16x8xf32>
    %cst = arith.constant dense<0.000000e+00> : vector<16x32xf32>
    %13 = tpu.matmul %12, %0, %cst {dimension_numbers = #tpu.dot_dimension_numbers<[1], [0], [0], [1], [0, 0, 1, 1], [], []>} : vector<16x8xf32>, vector<8x32xf32>, vector<16x32xf32> -> vector<16x32xf32>
    %14 = vector.shape_cast %4 : vector<1x32xf32> to vector<1x32xf32>
    %15 = vector.broadcast %14 : vector<1x32xf32> to vector<16x32xf32>
    %16 = arith.addf %13, %15 : vector<16x32xf32>
    %17 = vector.extract_strided_slice %13 {offsets = [0, 0], sizes = [2, 32], strides = [1, 1]} : vector<16x32xf32> to vector<2x32xf32>
    %18 = arith.addf %17, %7 : vector<2x32xf32>
    %19 = math.tanh %18 : vector<2x32xf32>
    %cst_8 = arith.constant dense<0.000000e+00> : vector<2x32xf32>
    %20 = tpu.matmul %19, %1, %cst_8 {dimension_numbers = #tpu.dot_dimension_numbers<[1], [0], [0], [1], [0, 0, 1, 1], [], []>} : vector<2x32xf32>, vector<32x32xf32>, vector<2x32xf32> -> vector<2x32xf32>
    %21 = vector.extract_strided_slice %16 {offsets = [2, 0], sizes = [2, 32], strides = [1, 1]} : vector<16x32xf32> to vector<2x32xf32>
    %22 = arith.addf %20, %21 : vector<2x32xf32>
    %23 = math.tanh %22 : vector<2x32xf32>
    %cst_9 = arith.constant dense<0.000000e+00> : vector<2x32xf32>
    %24 = tpu.matmul %23, %1, %cst_9 {dimension_numbers = #tpu.dot_dimension_numbers<[1], [0], [0], [1], [0, 0, 1, 1], [], []>} : vector<2x32xf32>, vector<32x32xf32>, vector<2x32xf32> -> vector<2x32xf32>
    %25 = vector.extract_strided_slice %16 {offsets = [4, 0], sizes = [2, 32], strides = [1, 1]} : vector<16x32xf32> to vector<2x32xf32>
    %26 = arith.addf %24, %25 : vector<2x32xf32>
    %27 = math.tanh %26 : vector<2x32xf32>
    %cst_10 = arith.constant dense<0.000000e+00> : vector<2x32xf32>
    %28 = tpu.matmul %27, %1, %cst_10 {dimension_numbers = #tpu.dot_dimension_numbers<[1], [0], [0], [1], [0, 0, 1, 1], [], []>} : vector<2x32xf32>, vector<32x32xf32>, vector<2x32xf32> -> vector<2x32xf32>
    %29 = vector.extract_strided_slice %16 {offsets = [6, 0], sizes = [2, 32], strides = [1, 1]} : vector<16x32xf32> to vector<2x32xf32>
    %30 = arith.addf %28, %29 : vector<2x32xf32>
    %31 = math.tanh %30 : vector<2x32xf32>
    %cst_11 = arith.constant dense<0.000000e+00> : vector<2x32xf32>
    %32 = tpu.matmul %31, %1, %cst_11 {dimension_numbers = #tpu.dot_dimension_numbers<[1], [0], [0], [1], [0, 0, 1, 1], [], []>} : vector<2x32xf32>, vector<32x32xf32>, vector<2x32xf32> -> vector<2x32xf32>
    %33 = vector.extract_strided_slice %16 {offsets = [8, 0], sizes = [2, 32], strides = [1, 1]} : vector<16x32xf32> to vector<2x32xf32>
    %34 = arith.addf %32, %33 : vector<2x32xf32>
    %35 = math.tanh %34 : vector<2x32xf32>
    %cst_12 = arith.constant dense<0.000000e+00> : vector<2x32xf32>
    %36 = tpu.matmul %35, %1, %cst_12 {dimension_numbers = #tpu.dot_dimension_numbers<[1], [0], [0], [1], [0, 0, 1, 1], [], []>} : vector<2x32xf32>, vector<32x32xf32>, vector<2x32xf32> -> vector<2x32xf32>
    %37 = vector.extract_strided_slice %16 {offsets = [10, 0], sizes = [2, 32], strides = [1, 1]} : vector<16x32xf32> to vector<2x32xf32>
    %38 = arith.addf %36, %37 : vector<2x32xf32>
    %39 = math.tanh %38 : vector<2x32xf32>
    %cst_13 = arith.constant dense<0.000000e+00> : vector<2x32xf32>
    %40 = tpu.matmul %39, %1, %cst_13 {dimension_numbers = #tpu.dot_dimension_numbers<[1], [0], [0], [1], [0, 0, 1, 1], [], []>} : vector<2x32xf32>, vector<32x32xf32>, vector<2x32xf32> -> vector<2x32xf32>
    %41 = vector.extract_strided_slice %16 {offsets = [12, 0], sizes = [2, 32], strides = [1, 1]} : vector<16x32xf32> to vector<2x32xf32>
    %42 = arith.addf %40, %41 : vector<2x32xf32>
    %43 = math.tanh %42 : vector<2x32xf32>
    %cst_14 = arith.constant dense<0.000000e+00> : vector<2x32xf32>
    %44 = tpu.matmul %43, %1, %cst_14 {dimension_numbers = #tpu.dot_dimension_numbers<[1], [0], [0], [1], [0, 0, 1, 1], [], []>} : vector<2x32xf32>, vector<32x32xf32>, vector<2x32xf32> -> vector<2x32xf32>
    %45 = vector.extract_strided_slice %16 {offsets = [14, 0], sizes = [2, 32], strides = [1, 1]} : vector<16x32xf32> to vector<2x32xf32>
    %46 = arith.addf %44, %45 : vector<2x32xf32>
    %47 = math.tanh %46 : vector<2x32xf32>
    %cst_15 = arith.constant dense<0.000000e+00> : vector<2x32xf32>
    %48 = tpu.matmul %47, %1, %cst_15 {dimension_numbers = #tpu.dot_dimension_numbers<[1], [0], [0], [1], [0, 0, 1, 1], [], []>} : vector<2x32xf32>, vector<32x32xf32>, vector<2x32xf32> -> vector<2x32xf32>
    %49 = arith.addf %48, %9 : vector<2x32xf32>
    %50 = math.tanh %49 : vector<2x32xf32>
    %cst_16 = arith.constant dense<0.000000e+00> : vector<2x32xf32>
    %51 = tpu.matmul %50, %2, %cst_16 {dimension_numbers = #tpu.dot_dimension_numbers<[1], [0], [0], [1], [0, 0, 1, 1], [], []>} : vector<2x32xf32>, vector<32x32xf32>, vector<2x32xf32> -> vector<2x32xf32>
    %52 = arith.addf %51, %11 : vector<2x32xf32>
    %53 = vector.extract_strided_slice %52 {offsets = [0, 0], sizes = [2, 4], strides = [1, 1]} : vector<2x32xf32> to vector<2x4xf32>
    %c0_17 = arith.constant 0 : index
    %c0_18 = arith.constant 0 : index
    %54 = vector.load %arg2[%c0_17, %c0_18] : memref<2x4xf32, #tpu.memory_space<vmem>>, vector<2x4xf32>
    tpu.vector_store %arg2[%c0_17, %c0_18], %53 {strides = array<i32>} : memref<2x4xf32, #tpu.memory_space<vmem>>, vector<2x4xf32>,
    return
  }
}

</mosaic_0001>

<llo_original>
// kernel: tpu_custom_call.1
$region0: #{tpu_custom_call.1}
  #allocation0 [shape = 'u32[]', space=smem, size = 0x4, offset = 0x4, fixed_abs, tag = 'smem constant byte address 0x4 - core index']
  #allocation1 [shape = 'u32[72,128]{1,0:T(1,128)}', space=vmem, size = 0x9000, scoped, tag = 'internal scratch']
  %s0 = inlined_call_operand.vmem [shape: f32[16,8], index: 0, kind: input, shape index: {}]
  %s1 = inlined_call_operand.vmem [shape: f32[80,32], index: 1, kind: input, shape index: {}]
  %s2 = inlined_call_operand.hbm [shape: f32[2,4], index: 2, kind: output, shape index: {}]
  %s3 = sld [smem:[#allocation0]]
  $region18: #{tpu_custom_call.1} parent=0
    _
  %s5 = ssub.s32 1, %s3
  %s6 = scalar_select 0, %s5, %s3
  $region1: #{tpu_custom_call.1} parent=0
    #allocation2 [shape = 'u8[1024]{0}', space=vmem, size = 0x400, scoped, tag = 'output window, operand 0, single buffered']
    #allocation3 [shape = 's32[1]{0}', space=sflag, size = 0x4, scoped, tag = 'scoped memory for tpu_custom_call.1']
    %7 = vsyncpa [#allocation3], 0
    // Predicated region
    $region2: #{tpu_custom_call.1} parent=1 // pred_check
      _
    $region3: #{tpu_custom_call.1} parent=1 // pred_check_branch
      %9 = sbr.rel (0) target = $region5
    $region4: #{tpu_custom_call.1} parent=1 // pred_region
      _
    $region5: #{tpu_custom_call.1} parent=1 // pred_fallthru
      _
    // Predicated region
    $region6: #{tpu_custom_call.1} parent=1 // pred_check
      _
    $region7: #{tpu_custom_call.1} parent=1 // pred_check_branch
      %11 = sbr.rel (0) target = $region9
    $region8: #{tpu_custom_call.1} parent=1 // pred_region
      _
    $region9: #{tpu_custom_call.1} parent=1 // pred_fallthru
      _
    %v12 = vld [vmem:[%s1] sm:$0xff]
    %v13 = vld [vmem:[%s1 + $0x8] sm:$0xff]
    %v14 = vld [vmem:[%s1 + $0x10] sm:$0xff]
    %v15 = vld [vmem:[%s1 + $0x18] sm:$0xff]
    %v16 = vld [vmem:[%s1 + $0x20] sm:$0xff]
    %v17 = vld [vmem:[%s1 + $0x30] sm:$0xff]
    %v18 = vld [vmem:[%s1 + $0x38] sm:$0xff]
    %v19 = vld [vmem:[%s1 + $0x40] sm:$0xff]
    %v20 = vld [vmem:[%s1 + $0x48] sm:$0xff]
    %v21 = vld [vmem:[%s1 + $0x28] sm:$0x1]
    %v22 = vld [vmem:[%s1 + $0x29] sm:$0x1]
    %v23 = vld [vmem:[%s1 + $0x2a] sm:$0x1]
    %v24 = vperm.slane %v21, 0
    %v25 = vperm.slane %v22, 0
    %v26 = vperm.slane %v23, 0
    %v27 = vld [vmem:[%s0] sm:$0xff]
    %v28 = vld [vmem:[%s0 + $0x8] sm:$0xff]
    %vm29 = vcmask 64512
    %v31 = vsel %vm29, %v27, 0
    %v34 = vsel %vm29, %v28, 0
    %36 = vmatpush.msra.mxu0 0.0
    %37 = vmatpush.msra.mxu0 0.0
    %38 = vmatpush.msra.mxu0 0.0
    %39 = vmatpush.msra.mxu0 0.0
    %40 = vmatpush.msra.mxu0 0.0
    %41 = vmatpush.msra.mxu0 0.0
    %42 = vmatpush.msra.mxu0 0.0
    %43 = vmatpush.msra.mxu0 0.0
    %44 = vmatpush.msra.mxu0 0.0
    %45 = vmatpush.msra.mxu0 0.0
    %46 = vmatpush.msra.mxu0 0.0
    %47 = vmatpush.msra.mxu0 0.0
    %48 = vmatpush.msra.mxu0 0.0
    %49 = vmatpush.msra.mxu0 0.0
    %50 = vmatpush.msra.mxu0 0.0
    %51 = vmatpush.msra.mxu0 %v12
    %52 = vmatmul.f32.gmra.mxu0 %v31
    %v53 = vpop.f32.mrf.mxu0
    %v54 = vadd.f32 0.0, %v53
    %55 = vmatmul.f32.gmra.mxu0 %v34
    %v56 = vpop.f32.mrf.mxu0
    %v57 = vadd.f32 0.0, %v56
    %58 = vdwg.mxu0
    %v59 = vadd.f32 %v54, %v25
    %v60 = vadd.f32 %v57, %v25
    %v61 = vadd.f32 %v54, %v24
    %v62 = vtanh.pop %v61
    %v64 = vrot.slane %v59, 2
    %vm66 = vcmask 261120
    %v68 = vsel %vm66, %v62, 0
    %70 = vmatpush.msra.mxu0 0.0
    %71 = vmatpush.msra.mxu0 0.0
    %72 = vmatpush.msra.mxu0 0.0
    %73 = vmatpush.msra.mxu0 0.0
    %74 = vmatpush.msra.mxu0 0.0
    %75 = vmatpush.msra.mxu0 0.0
    %76 = vmatpush.msra.mxu0 0.0
    %77 = vmatpush.msra.mxu0 0.0
    %78 = vmatpush.msra.mxu0 0.0
    %79 = vmatpush.msra.mxu0 0.0
    %80 = vmatpush.msra.mxu0 0.0
    %81 = vmatpush.msra.mxu0 0.0
    %82 = vmatpush.msra.mxu0 %v16
    %83 = vmatpush.msra.mxu0 %v15
    %84 = vmatpush.msra.mxu0 %v14
    %85 = vmatpush.msra.mxu0 %v13
    %86 = vmatmul.f32.gmra.mxu0 %v68
    %v87 = vpop.f32.mrf.mxu0
    %v88 = vadd.f32 %v64, %v87
    %89 = vdwg.mxu0
    %v90 = vtanh.pop %v88
    %v91 = vrot.slane %v59, 4
    %v94 = vsel %vm66, %v90, 0
    %96 = vmatpush.msra.mxu0 0.0
    %97 = vmatpush.msra.mxu0 0.0
    %98 = vmatpush.msra.mxu0 0.0
    %99 = vmatpush.msra.mxu0 0.0
    %100 = vmatpush.msra.mxu0 0.0
    %101 = vmatpush.msra.mxu0 0.0
    %102 = vmatpush.msra.mxu0 0.0
    %103 = vmatpush.msra.mxu0 0.0
    %104 = vmatpush.msra.mxu0 0.0
    %105 = vmatpush.msra.mxu0 0.0
    %106 = vmatpush.msra.mxu0 0.0
    %107 = vmatpush.msra.mxu0 0.0
    %108 = vmatpush.msra.mxu0 %v16
    %109 = vmatpush.msra.mxu0 %v15
    %110 = vmatpush.msra.mxu0 %v14
    %111 = vmatpush.msra.mxu0 %v13
    %112 = vmatmul.f32.gmra.mxu0 %v94
    %v113 = vpop.f32.mrf.mxu0
    %v114 = vadd.f32 %v91, %v113
    %115 = vdwg.mxu0
    %v116 = vtanh.pop %v114
    %v117 = vrot.slane %v59, 6
    %v120 = vsel %vm66, %v116, 0
    %122 = vmatpush.msra.mxu0 0.0
    %123 = vmatpush.msra.mxu0 0.0
    %124 = vmatpush.msra.mxu0 0.0
    %125 = vmatpush.msra.mxu0 0.0
    %126 = vmatpush.msra.mxu0 0.0
    %127 = vmatpush.msra.mxu0 0.0
    %128 = vmatpush.msra.mxu0 0.0
    %129 = vmatpush.msra.mxu0 0.0
    %130 = vmatpush.msra.mxu0 0.0
    %131 = vmatpush.msra.mxu0 0.0
    %132 = vmatpush.msra.mxu0 0.0
    %133 = vmatpush.msra.mxu0 0.0
    %134 = vmatpush.msra.mxu0 %v16
    %135 = vmatpush.msra.mxu0 %v15
    %136 = vmatpush.msra.mxu0 %v14
    %137 = vmatpush.msra.mxu0 %v13
    %138 = vmatmul.f32.gmra.mxu0 %v120
    %v139 = vpop.f32.mrf.mxu0
    %v140 = vadd.f32 %v117, %v139
    %141 = vdwg.mxu0
    %v142 = vtanh.pop %v140
    %v144 = vsel %vm66, %v142, 0
    %146 = vmatpush.msra.mxu0 0.0
    %147 = vmatpush.msra.mxu0 0.0
    %148 = vmatpush.msra.mxu0 0.0
    %149 = vmatpush.msra.mxu0 0.0
    %150 = vmatpush.msra.mxu0 0.0
    %151 = vmatpush.msra.mxu0 0.0
    %152 = vmatpush.msra.mxu0 0.0
    %153 = vmatpush.msra.mxu0 0.0
    %154 = vmatpush.msra.mxu0 0.0
    %155 = vmatpush.msra.mxu0 0.0
    %156 = vmatpush.msra.mxu0 0.0
    %157 = vmatpush.msra.mxu0 0.0
    %158 = vmatpush.msra.mxu0 %v16
    %159 = vmatpush.msra.mxu0 %v15
    %160 = vmatpush.msra.mxu0 %v14
    %161 = vmatpush.msra.mxu0 %v13
    %162 = vmatmul.f32.gmra.mxu0 %v144
    %v163 = vpop.f32.mrf.mxu0
    %v164 = vadd.f32 %v60, %v163
    %165 = vdwg.mxu0
    %v166 = vtanh.pop %v164
    %v168 = vrot.slane %v60, 2
    %v171 = vsel %vm66, %v166, 0
    %173 = vmatpush.msra.mxu0 0.0
    %174 = vmatpush.msra.mxu0 0.0
    %175 = vmatpush.msra.mxu0 0.0
    %176 = vmatpush.msra.mxu0 0.0
    %177 = vmatpush.msra.mxu0 0.0
    %178 = vmatpush.msra.mxu0 0.0
    %179 = vmatpush.msra.mxu0 0.0
    %180 = vmatpush.msra.mxu0 0.0
    %181 = vmatpush.msra.mxu0 0.0
    %182 = vmatpush.msra.mxu0 0.0
    %183 = vmatpush.msra.mxu0 0.0
    %184 = vmatpush.msra.mxu0 0.0
    %185 = vmatpush.msra.mxu0 %v16
    %186 = vmatpush.msra.mxu0 %v15
    %187 = vmatpush.msra.mxu0 %v14
    %188 = vmatpush.msra.mxu0 %v13
    %189 = vmatmul.f32.gmra.mxu0 %v171
    %v190 = vpop.f32.mrf.mxu0
    %v191 = vadd.f32 %v168, %v190
    %192 = vdwg.mxu0
    %v193 = vtanh.pop %v191
    %v194 = vrot.slane %v60, 4
    %v197 = vsel %vm66, %v193, 0
    %199 = vmatpush.msra.mxu0 0.0
    %200 = vmatpush.msra.mxu0 0.0
    %201 = vmatpush.msra.mxu0 0.0
    %202 = vmatpush.msra.mxu0 0.0
    %203 = vmatpush.msra.mxu0 0.0
    %204 = vmatpush.msra.mxu0 0.0
    %205 = vmatpush.msra.mxu0 0.0
    %206 = vmatpush.msra.mxu0 0.0
    %207 = vmatpush.msra.mxu0 0.0
    %208 = vmatpush.msra.mxu0 0.0
    %209 = vmatpush.msra.mxu0 0.0
    %210 = vmatpush.msra.mxu0 0.0
    %211 = vmatpush.msra.mxu0 %v16
    %212 = vmatpush.msra.mxu0 %v15
    %213 = vmatpush.msra.mxu0 %v14
    %214 = vmatpush.msra.mxu0 %v13
    %215 = vmatmul.f32.gmra.mxu0 %v197
    %v216 = vpop.f32.mrf.mxu0
    %v217 = vadd.f32 %v194, %v216
    %218 = vdwg.mxu0
    %v219 = vtanh.pop %v217
    %v220 = vrot.slane %v60, 6
    %v223 = vsel %vm66, %v219, 0
    %225 = vmatpush.msra.mxu0 0.0
    %226 = vmatpush.msra.mxu0 0.0
    %227 = vmatpush.msra.mxu0 0.0
    %228 = vmatpush.msra.mxu0 0.0
    %229 = vmatpush.msra.mxu0 0.0
    %230 = vmatpush.msra.mxu0 0.0
    %231 = vmatpush.msra.mxu0 0.0
    %232 = vmatpush.msra.mxu0 0.0
    %233 = vmatpush.msra.mxu0 0.0
    %234 = vmatpush.msra.mxu0 0.0
    %235 = vmatpush.msra.mxu0 0.0
    %236 = vmatpush.msra.mxu0 0.0
    %237 = vmatpush.msra.mxu0 %v16
    %238 = vmatpush.msra.mxu0 %v15
    %239 = vmatpush.msra.mxu0 %v14
    %240 = vmatpush.msra.mxu0 %v13
    %241 = vmatmul.f32.gmra.mxu0 %v223
    %v242 = vpop.f32.mrf.mxu0
    %v243 = vadd.f32 %v220, %v242
    %244 = vdwg.mxu0
    %v245 = vtanh.pop %v243
    %v247 = vsel %vm66, %v245, 0
    %249 = vmatpush.msra.mxu0 0.0
    %250 = vmatpush.msra.mxu0 0.0
    %251 = vmatpush.msra.mxu0 0.0
    %252 = vmatpush.msra.mxu0 0.0
    %253 = vmatpush.msra.mxu0 0.0
    %254 = vmatpush.msra.mxu0 0.0
    %255 = vmatpush.msra.mxu0 0.0
    %256 = vmatpush.msra.mxu0 0.0
    %257 = vmatpush.msra.mxu0 0.0
    %258 = vmatpush.msra.mxu0 0.0
    %259 = vmatpush.msra.mxu0 0.0
    %260 = vmatpush.msra.mxu0 0.0
    %261 = vmatpush.msra.mxu0 %v16
    %262 = vmatpush.msra.mxu0 %v15
    %263 = vmatpush.msra.mxu0 %v14
    %264 = vmatpush.msra.mxu0 %v13
    %265 = vmatmul.f32.gmra.mxu0 %v247
    %v266 = vpop.f32.mrf.mxu0
    %v267 = vadd.f32 %v25, %v266
    %268 = vdwg.mxu0
    %v269 = vtanh.pop %v267
    %v271 = vsel %vm66, %v269, 0
    %273 = vmatpush.msra.mxu0 0.0
    %274 = vmatpush.msra.mxu0 0.0
    %275 = vmatpush.msra.mxu0 0.0
    %276 = vmatpush.msra.mxu0 0.0
    %277 = vmatpush.msra.mxu0 0.0
    %278 = vmatpush.msra.mxu0 0.0
    %279 = vmatpush.msra.mxu0 0.0
    %280 = vmatpush.msra.mxu0 0.0
    %281 = vmatpush.msra.mxu0 0.0
    %282 = vmatpush.msra.mxu0 0.0
    %283 = vmatpush.msra.mxu0 0.0
    %284 = vmatpush.msra.mxu0 0.0
    %285 = vmatpush.msra.mxu0 %v20
    %286 = vmatpush.msra.mxu0 %v19
    %287 = vmatpush.msra.mxu0 %v18
    %288 = vmatpush.msra.mxu0 %v17
    %289 = vmatmul.f32.gmra.mxu0 %v271
    %v290 = vpop.f32.mrf.mxu0
    %v291 = vadd.f32 %v26, %v290
    %292 = vdwg.mxu0
    %vm293 = vcmask 25600
    %294 = vst.msk [vmem:[#allocation2] sm:$0x3] %vm293, %v291
    // Predicated region
    $region10: #{tpu_custom_call.1} parent=1 // pred_check
      _
    $region11: #{tpu_custom_call.1} parent=1 // pred_check_branch
      %296 = sbr.rel (0) target = $region13
    $region12: #{tpu_custom_call.1} parent=1 // pred_region
      %298 = vsyncadd [#allocation3], 0
      %s300 = sshll.u32 [#allocation2], 4
      %s301 = int_to_ptr.vmem [resolvable:$true] %s300
      %s302 = sshll.u32 %s2, 4
      %s303 = int_to_ptr.hbm [resolvable:$true] %s302
      %305 = dma.vmem_to_hbm [thread:$0]  %s301, 32, %s303, [#allocation3]
    $region13: #{tpu_custom_call.1} parent=1 // pred_fallthru
      _
    // Predicated region
    $region14: #{tpu_custom_call.1} parent=1 // pred_check
      _
    $region15: #{tpu_custom_call.1} parent=1 // pred_check_branch
      %307 = sbr.rel (0) target = $region17
    $region16: #{tpu_custom_call.1} parent=1 // pred_region
      %309 = dma.done [#allocation3], 32
    $region17: #{tpu_custom_call.1} parent=1 // pred_fallthru
      _
    %310 = vsyncpa [#allocation3], 1

</llo_original>
